<compile_context>
chip_gen: v7x
topology: tpu7x:2x2x1
jax: 0.10.0
libtpu: 0.0.40
codegen_flags: <defaults>
</compile_context>

<pallas_src>
import functools

import jax
import jax.numpy as jnp
from jax.experimental import pallas as pl
from jax.experimental.pallas import tpu as pltpu


def _fm_kernel(x_ref, fold_ref, o_ref, *, num_fields, embed_dim):
    """x_ref: (tb, F*D) tile; fold_ref: (F*D, D) 0/1 fold matrix; o_ref: (1, tb)."""
    F, D = num_fields, embed_dim
    L = F * D

    if x_ref.dtype.itemsize < 4:
        # Sub-32-bit (bf16) inputs: HBM bytes are halved, so keep VPU/XLU work
        # minimal.  Field-sum on the MXU: s[b, d] = sum_f x[b, f*D + d].
        # 0/1 weights + f32 accumulation -> exact sum of the bf16 inputs.
        s = jnp.dot(x_ref[...], fold_ref[...],
                    preferred_element_type=jnp.float32)              # (tb, D)
        # term2 = sum_l x[b, l]^2, streamed in 128-lane (vreg-aligned) chunks so
        # only ~one chunk of f32 temporaries is ever live (no full-tile upcast).
        t2 = None
        for c0 in range(0, L, 128):
            xc = x_ref[:, c0:min(c0 + 128, L)].astype(jnp.float32)   # (tb, <=128)
            part = jnp.sum(xc * xc, axis=-1)                         # (tb,)
            t2 = part if t2 is None else t2 + part
        t1 = jnp.sum(s * s, axis=-1)                                 # (tb,)
        out = 0.5 * (t1 - t2)
    else:
        # f32 inputs: 2x HBM time gives the VPU path headroom; stream per field
        # straight from the ref (no whole-tile temporaries), accumulate the
        # per-dim sum `s` and per-dim sum-of-squares `q`, and do a single
        # cross-lane reduce at the end.
        xf = x_ref[:, 0:D]
        s = xf
        q = xf * xf
        for f in range(1, F):
            xf = x_ref[:, f * D:(f + 1) * D]
            s = s + xf
            q = q + xf * xf
        out = 0.5 * jnp.sum(s * s - q, axis=-1)                      # (tb,)

    o_ref[0, :] = out.astype(o_ref.dtype)


def _round_up(x, m):
    return ((x + m - 1) // m) * m


def _choose_tb(row_bytes):
    """Rows per grid step, sized by bytes (not by a forced step count).

    Targets ~8 MiB per input buffer (~16 MiB double-buffered): HBM drain time
    per step is ~5 us on v7x (1.6 TB/s per TC), ~6 us on v6e, ~10 us on v5e, so
    the ~0.35 us per-step pipeline overhead stays at a few percent.  Row cap is
    8192 (lifted from 2048) for small-L / large-B cases.
    """
    budget = 8 * 1024 * 1024
    tb = (budget // max(row_bytes, 1)) // 128 * 128
    return int(max(128, min(8192, tb)))


def factorization_machine(x, *, tb=None):
    """FM bi-interaction pooling.  x: (B, F, D) -> (B, 1), dtype preserved."""
    B, F, D = x.shape
    L = F * D
    x2 = x.reshape(B, L)               # free: collapses contiguous trailing dims

    itemsize = x.dtype.itemsize
    lane_pad = _round_up(L, 128)
    row_bytes = lane_pad * itemsize

    if tb is None:
        tb = _choose_tb(row_bytes)
    if tb >= B:
        # One block would cover the whole batch.  If there is enough batch,
        # split it in two so the "parallel" axis can shard across v7x's two
        # TensorCores and the DMA pipeline has >= 2 steps to overlap.
        tb = _round_up(pl.cdiv(B, 2), 128) if B >= 256 else B
    else:
        tb = max(128, (tb // 128) * 128)   # lane-dense (1, tb) output needs %128
    grid = pl.cdiv(B, tb)

    # Static 0/1 field-fold matrix: fold[f*D + d, d] = 1 (exact in any float
    # dtype).  Resident in VMEM (constant block index -> fetched once).
    fold = jnp.tile(jnp.eye(D, dtype=x.dtype), (F, 1))               # (L, D)

    # VMEM budget derived from the actual padded tile bytes (+ rough in-kernel
    # f32 temporary estimate + margin), capped well inside v7x's 64 MiB/TC.
    in_tile = tb * lane_pad * itemsize
    out_tile = 8 * _round_up(tb, 128) * itemsize                     # (1, tb) pads to 8 sublanes
    fold_tile = _round_up(L, 16) * 128 * itemsize
    f32_temps = 3 * tb * 128 * 4                                     # chunk temps / s / q
    need = 2 * (in_tile + out_tile) + 2 * fold_tile + f32_temps
    vmem_limit = int(min(48 * 1024 * 1024,
                         max(need + 8 * 1024 * 1024, 16 * 1024 * 1024)))

    kernel = functools.partial(_fm_kernel, num_fields=F, embed_dim=D)

    cost = pl.CostEstimate(
        flops=2 * B * L * D + 4 * B * L,        # MXU fold + squares/adds (approx)
        transcendentals=0,
        bytes_accessed=B * L * itemsize + L * D * itemsize + B * itemsize)

    out = pl.pallas_call(
        kernel,
        out_shape=jax.ShapeDtypeStruct((1, B), x.dtype),
        grid=(grid,),
        in_specs=[pl.BlockSpec((tb, L), lambda b: (b, 0)),
                  pl.BlockSpec((L, D), lambda b: (0, 0))],
        out_specs=pl.BlockSpec((1, tb), lambda b: (0, b)),
        compiler_params=pltpu.CompilerParams(
            dimension_semantics=("parallel",),
            vmem_limit_bytes=vmem_limit),
        cost_estimate=cost,
    )(x2, fold)
    return out.reshape(B, 1)


def factorization_machine_ref(x):
    xf = x.astype(jnp.float32)
    sum_of_square = jnp.sum(xf, axis=1) ** 2
    square_of_sum = jnp.sum(xf ** 2, axis=1)
    bi = 0.5 * (sum_of_square - square_of_sum)
    return jnp.sum(bi, axis=-1, keepdims=True)


if __name__ == "__main__":
    key = jax.random.PRNGKey(0)
    k1, k2, k3 = jax.random.split(key, 3)

    # Case 1: tiny shape from the module spec (single-block path, f32).
    B, F, D = 8, 4, 32
    x = jax.random.normal(k1, (B, F, D), dtype=jnp.float32)
    out = jax.block_until_ready(factorization_machine(x))
    ref = factorization_machine_ref(x)
    assert out.shape == (B, 1)
    assert jnp.allclose(out.astype(jnp.float32), ref, rtol=1e-4, atol=1e-3), (out, ref)

    # Case 2a: multi-block pipelined path with a partial last block (B % tb != 0)
    # and a non-128-aligned flattened feature width (explicit small tb).
    B2, F2, D2 = 300, 6, 24
    x_big = jax.random.normal(k2, (B2, F2, D2), dtype=jnp.float32)
    out_big = jax.block_until_ready(factorization_machine(x_big, tb=128))
    ref_big = factorization_machine_ref(x_big)
    assert out_big.shape == (B2, 1)
    assert jnp.allclose(out_big.astype(jnp.float32), ref_big, rtol=1e-4, atol=1e-3)

    # Case 2b: default tb exercises the megacore-split branch (B >= 256 -> 2 steps).
    out_big2 = jax.block_until_ready(factorization_machine(x_big))
    assert jnp.allclose(out_big2.astype(jnp.float32), ref_big, rtol=1e-4, atol=1e-3)

    # Case 3: bf16 embeddings -> MXU field-fold path; output dtype matches input
    # dtype like the PyTorch module.
    x_bf16 = jax.random.normal(k3, (B2, F2, D2), dtype=jnp.bfloat16)
    out_bf16 = jax.block_until_ready(factorization_machine(x_bf16))
    ref_bf16 = factorization_machine_ref(x_bf16)
    assert out_bf16.shape == (B2, 1) and out_bf16.dtype == jnp.bfloat16
    assert jnp.allclose(out_bf16.astype(jnp.float32), ref_bf16, rtol=2e-2, atol=2e-1)

    print("KERNEL_OK")
</pallas_src>

<mosaic_0001>
module attributes {stable_mosaic.version = 11 : i64} {
  func.func @_fm_kernel(%arg0: i32, %arg1: memref<8x128xf32, #tpu.memory_space<vmem>>, %arg2: memref<128x32xf32, #tpu.memory_space<vmem>>, %arg3: memref<1x8xf32, #tpu.memory_space<vmem>>) attributes {dimension_semantics = [#tpu.dimension_semantics<parallel>], iteration_bounds = array<i64: 1>, scalar_prefetch = 0 : i64, scratch_operands = 0 : i64, tpu.core_type = #tpu.core_type<tc>, window_params = [{transform_indices = @transform_0, window_bounds = array<i64: 8, 128>}, {pipeline_mode = #tpu.pipeline_mode<synchronous>, transform_indices = @transform_1, window_bounds = array<i64: 128, 32>}, {transform_indices = @transform_2, window_bounds = array<i64: 1, 8>}]} {
    %c0 = arith.constant 0 : index
    %c0_0 = arith.constant 0 : index
    %0 = vector.load %arg1[%c0, %c0_0] : memref<8x128xf32, #tpu.memory_space<vmem>>, vector<8x32xf32>
    %1 = arith.mulf %0, %0 : vector<8x32xf32>
    %c0_1 = arith.constant 0 : index
    %c32 = arith.constant 32 : index
    %2 = vector.load %arg1[%c0_1, %c32] : memref<8x128xf32, #tpu.memory_space<vmem>>, vector<8x32xf32>
    %3 = arith.addf %0, %2 : vector<8x32xf32>
    %4 = arith.mulf %2, %2 : vector<8x32xf32>
    %5 = arith.addf %1, %4 : vector<8x32xf32>
    %c0_2 = arith.constant 0 : index
    %c64 = arith.constant 64 : index
    %6 = vector.load %arg1[%c0_2, %c64] : memref<8x128xf32, #tpu.memory_space<vmem>>, vector<8x32xf32>
    %7 = arith.addf %3, %6 : vector<8x32xf32>
    %8 = arith.mulf %6, %6 : vector<8x32xf32>
    %9 = arith.addf %5, %8 : vector<8x32xf32>
    %c0_3 = arith.constant 0 : index
    %c96 = arith.constant 96 : index
    %10 = vector.load %arg1[%c0_3, %c96] : memref<8x128xf32, #tpu.memory_space<vmem>>, vector<8x32xf32>
    %11 = arith.addf %7, %10 : vector<8x32xf32>
    %12 = arith.mulf %10, %10 : vector<8x32xf32>
    %13 = arith.addf %9, %12 : vector<8x32xf32>
    %14 = arith.mulf %11, %11 : vector<8x32xf32>
    %15 = arith.subf %14, %13 : vector<8x32xf32>
    %cst = arith.constant dense<0.000000e+00> : vector<8xf32>
    %16 = vector.multi_reduction <add>, %15, %cst [1] : vector<8x32xf32> to vector<8xf32>
    %cst_4 = arith.constant 5.000000e-01 : f32
    %17 = vector.broadcast %cst_4 : f32 to vector<8xf32>
    %18 = arith.mulf %17, %16 : vector<8xf32>
    %c0_5 = arith.constant 0 : index
    %c0_6 = arith.constant 0 : index
    %19 = vector.load %arg3[%c0_5, %c0_6] : memref<1x8xf32, #tpu.memory_space<vmem>>, vector<1x8xf32>
    %20 = vector.shape_cast %19 : vector<1x8xf32> to vector<8xf32>
    %21 = vector.shape_cast %18 : vector<8xf32> to vector<1x8xf32>
    tpu.vector_store %arg3[%c0_5, %c0_6], %21 {strides = array<i32>} : memref<1x8xf32, #tpu.memory_space<vmem>>, vector<1x8xf32>,
    return
  }
  func.func @transform_0(%arg0: i32) -> (i32, i32) {
    %c0_i32 = arith.constant 0 : i32
    %c0_i32_0 = arith.constant 0 : i32
    return %arg0, %c0_i32 : i32, i32
  }
  func.func @transform_1(%arg0: i32) -> (i32, i32) {
    %c0_i32 = arith.constant 0 : i32
    %c0_i32_0 = arith.constant 0 : i32
    %c0_i32_1 = arith.constant 0 : i32
    return %c0_i32, %c0_i32_0 : i32, i32
  }
  func.func @transform_2(%arg0: i32) -> (i32, i32) {
    %c0_i32 = arith.constant 0 : i32
    %c0_i32_0 = arith.constant 0 : i32
    return %c0_i32, %arg0 : i32, i32
  }
}

</mosaic_0001>

<llo_original>
// kernel: tpu_custom_call.1
$region0: #{tpu_custom_call.1}
  #allocation0 [shape = 'u32[]', space=smem, size = 0x4, offset = 0x4, fixed_abs, tag = 'smem constant byte address 0x4 - core index']
  #allocation1 [shape = 'u32[144,128]{1,0:T(1,128)}', space=vmem, size = 0x12000, scoped, tag = 'internal scratch']
  %s0 = inlined_call_operand.vmem [shape: f32[8,128], index: 0, kind: input, shape index: {}]
  %s1 = inlined_call_operand.vmem [shape: f32[128,32], index: 1, kind: input, shape index: {}]
  %s2 = inlined_call_operand.hbm [shape: f32[1,8], index: 2, kind: output, shape index: {}]
  %s3 = sld [smem:[#allocation0]]
  $region18: #{tpu_custom_call.1} parent=0
    _
  %s5 = ssub.s32 1, %s3
  %s6 = scalar_select 0, %s5, %s3
  $region1: #{tpu_custom_call.1} parent=0
    #allocation2 [shape = 'u8[512]{0}', space=vmem, size = 0x400, scoped, tag = 'output window, operand 0, single buffered']
    #allocation3 [shape = 's32[1]{0}', space=sflag, size = 0x4, scoped, tag = 'scoped memory for tpu_custom_call.1']
    %7 = vsyncpa [#allocation3], 0
    // Predicated region
    $region2: #{tpu_custom_call.1} parent=1 // pred_check
      _
    $region3: #{tpu_custom_call.1} parent=1 // pred_check_branch
      %9 = sbr.rel (0) target = $region5
    $region4: #{tpu_custom_call.1} parent=1 // pred_region
      _
    $region5: #{tpu_custom_call.1} parent=1 // pred_fallthru
      _
    // Predicated region
    $region6: #{tpu_custom_call.1} parent=1 // pred_check
      _
    $region7: #{tpu_custom_call.1} parent=1 // pred_check_branch
      %11 = sbr.rel (0) target = $region9
    $region8: #{tpu_custom_call.1} parent=1 // pred_region
      _
    $region9: #{tpu_custom_call.1} parent=1 // pred_fallthru
      _
    %v12 = vld [vmem:[%s0] sm:$0xff]
    %v13 = vmul.f32 %v12, %v12
    %15 = vrot.lane.b32.xlu0 %v12, 96
    %v16 = vpop.permute.xlu0 %15
    %v18 = vadd.f32 %v12, %v16
    %20 = vrot.lane.b32.xlu0 %v13, 96
    %v21 = vpop.permute.xlu0 %20
    %v23 = vadd.f32 %v13, %v21
    %24 = vrot.lane.b32.xlu0 %v12, 64
    %v25 = vpop.permute.xlu0 %24
    %v27 = vadd.f32 %v18, %v25
    %28 = vrot.lane.b32.xlu0 %v13, 64
    %v29 = vpop.permute.xlu0 %28
    %v31 = vadd.f32 %v23, %v29
    %32 = vrot.lane.b32.xlu0 %v12, 32
    %v33 = vpop.permute.xlu0 %32
    %v35 = vadd.f32 %v27, %v33
    %36 = vrot.lane.b32.xlu0 %v13, 32
    %v37 = vpop.permute.xlu0 %36
    %v39 = vadd.f32 %v31, %v37
    %v40 = vmul.f32 %v35, %v35
    %v41 = vsub.f32 %v40, %v39
    %vm42 = vcmask 261120
    %v43 = vsel %vm42, %v41, 0.0
    %44 = vadd.xlane.f32.xlu0 %v43
    %v45 = vpop.xlane.xlu0 %44
    %v46 = vmul.f32 %v45, 0.5
    %v48 = vlaneseq
    %v49 = vand.u32 %v48, 127
    %v50 = vlaneseq
    %v51 = vshrl.u32 %v50, 7
    %v52 = vsub.s32 %v49, %v51
    %v53 = vrot.slane %v46, %v52
    %vm55 = vcmask 57344
    %56 = vst.msk [vmem:[#allocation2] sm:$0x1] %vm55, %v53
    // Predicated region
    $region10: #{tpu_custom_call.1} parent=1 // pred_check
      _
    $region11: #{tpu_custom_call.1} parent=1 // pred_check_branch
      %58 = sbr.rel (0) target = $region13
    $region12: #{tpu_custom_call.1} parent=1 // pred_region
      %s60 = ssub.s32 16, 16
      %61 = vsyncadd [#allocation3], %s60
      %s63 = sshll.u32 [#allocation2], 4
      %s64 = int_to_ptr.vmem [resolvable:$true] %s63
      %66 = dma.vmem_to_hbm [thread:$0]  %s64, 16, %s2, [#allocation3]
    $region13: #{tpu_custom_call.1} parent=1 // pred_fallthru
      _
    // Predicated region
    $region14: #{tpu_custom_call.1} parent=1 // pred_check
      _
    $region15: #{tpu_custom_call.1} parent=1 // pred_check_branch
      %68 = sbr.rel (0) target = $region17
    $region16: #{tpu_custom_call.1} parent=1 // pred_region
      %69 = dma.done [#allocation3], 16
    $region17: #{tpu_custom_call.1} parent=1 // pred_fallthru
      _
    %70 = vsyncpa [#allocation3], 1

</llo_original>
